<compile_context>
chip_gen: v5e
topology: v5e:2x2
jax: 0.10.0
libtpu: 0.0.40
codegen_flags: <defaults>
</compile_context>

<pallas_src>
import jax
import jax.numpy as jnp
from jax.experimental import pallas as pl
from jax.experimental.pallas import tpu as pltpu

# Module buffers from ScalingLayer.__init__ (fixed constants).
_SHIFT = (-0.03, -0.088, -0.188)
_SCALE = (0.458, 0.448, 0.45)
# Folded constants:  (x - shift) / scale  ==  x * (1/scale) + (-shift/scale)
_INV_SCALE = tuple(1.0 / s for s in _SCALE)
_BIAS = tuple(-sh / s for sh, s in zip(_SHIFT, _SCALE))

_TARGET_BLOCK_BYTES = 2 * 1024 * 1024  # ~2 MiB per block (see header comment)


def _scaling_kernel_sublane_dense(inv_ref, bias_ref, x_ref, o_ref):
    """Block (1, 1, TS, 128); channel is grid axis 1; consts in SMEM."""
    ch = pl.program_id(1)
    a = inv_ref[ch]          # scalar f32 read from SMEM
    b = bias_ref[ch]
    x = x_ref[...].astype(jnp.float32)
    o_ref[...] = (x * a + b).astype(o_ref.dtype)


def _scaling_kernel_channel_in_block(x_ref, o_ref):
    """Fallback block (1, 3, TL); per-channel Python-float scalar FMAs."""
    for ch in range(3):
        xc = x_ref[:, ch, :].astype(jnp.float32)       # (1, TL)
        o_ref[:, ch, :] = (xc * _INV_SCALE[ch] + _BIAS[ch]).astype(o_ref.dtype)


def scaling_layer(inp: jax.Array) -> jax.Array:
    """Equivalent of ScalingLayer.forward for NCHW input with C == 3."""
    n, c, h, w = inp.shape
    assert c == 3, "ScalingLayer is defined for 3 channels"
    hw = h * w
    itemsize = jnp.dtype(inp.dtype).itemsize

    if hw % 128 == 0:
        # --- Sublane-dense path: view spatial as (rows, 128). ---
        rows = hw // 128
        ts_target = max(8, (_TARGET_BLOCK_BYTES // (128 * itemsize)) // 8 * 8)
        ts = rows if rows <= ts_target else ts_target   # full dim or mult of 8
        grid = (n, c, pl.cdiv(rows, ts))                # spatial fast-varying

        x4 = inp.reshape(n, c, rows, 128)               # free (contiguous view)
        inv = jnp.asarray(_INV_SCALE, dtype=jnp.float32)
        bias = jnp.asarray(_BIAS, dtype=jnp.float32)

        out = pl.pallas_call(
            _scaling_kernel_sublane_dense,
            out_shape=jax.ShapeDtypeStruct((n, c, rows, 128), inp.dtype),
            grid=grid,
            in_specs=[
                pl.BlockSpec(memory_space=pltpu.MemorySpace.SMEM),   # inv_scale (3,)
                pl.BlockSpec(memory_space=pltpu.MemorySpace.SMEM),   # bias      (3,)
                pl.BlockSpec((1, 1, ts, 128), lambda i, j, k: (i, j, k, 0)),
            ],
            out_specs=pl.BlockSpec((1, 1, ts, 128), lambda i, j, k: (i, j, k, 0)),
            compiler_params=pltpu.CompilerParams(
                dimension_semantics=("parallel", "parallel", "parallel")),
        )(inv, bias, x4)
        return out.reshape(n, c, h, w)

    # --- Fallback: ragged spatial size; channel stays inside the block. ---
    tl_target = max(128, (_TARGET_BLOCK_BYTES // (8 * itemsize)) // 128 * 128)
    tl = hw if hw <= tl_target else tl_target           # full dim or mult of 128
    grid = (n, pl.cdiv(hw, tl))                         # ragged last block masked

    x3 = inp.reshape(n, c, hw)
    out = pl.pallas_call(
        _scaling_kernel_channel_in_block,
        out_shape=jax.ShapeDtypeStruct((n, c, hw), inp.dtype),
        grid=grid,
        in_specs=[pl.BlockSpec((1, c, tl), lambda i, j: (i, 0, j))],
        out_specs=pl.BlockSpec((1, c, tl), lambda i, j: (i, 0, j)),
        compiler_params=pltpu.CompilerParams(
            dimension_semantics=("parallel", "parallel")),
    )(x3)
    return out.reshape(n, c, h, w)


if __name__ == "__main__":
    shift = jnp.array(_SHIFT, dtype=jnp.float32)[None, :, None, None]
    scale = jnp.array(_SCALE, dtype=jnp.float32)[None, :, None, None]

    # Primary check: H*W % 128 == 0 -> sublane-dense path.
    x = jax.random.normal(jax.random.PRNGKey(0), (2, 3, 16, 16), dtype=jnp.float32)
    out = scaling_layer(x)
    jax.block_until_ready(out)
    ref = (x - shift) / scale
    assert out.shape == x.shape and out.dtype == x.dtype
    assert jnp.allclose(out, ref, atol=1e-6, rtol=1e-5)

    # Secondary check: ragged spatial (H*W % 128 != 0) -> fallback path.
    x2 = jax.random.normal(jax.random.PRNGKey(1), (2, 3, 10, 12), dtype=jnp.float32)
    out2 = scaling_layer(x2)
    jax.block_until_ready(out2)
    ref2 = (x2 - shift) / scale
    assert out2.shape == x2.shape and out2.dtype == x2.dtype
    assert jnp.allclose(out2, ref2, atol=1e-6, rtol=1e-5)

    print("KERNEL_OK")
</pallas_src>

<mosaic_0001>
module attributes {stable_mosaic.version = 11 : i64} {
  func.func @_scaling_kernel_sublane_dense(%arg0: i32, %arg1: i32, %arg2: i32, %arg3: memref<3xf32, #tpu.memory_space<smem>>, %arg4: memref<3xf32, #tpu.memory_space<smem>>, %arg5: memref<1x1x2x128xf32, #tpu.memory_space<vmem>>, %arg6: memref<1x1x2x128xf32, #tpu.memory_space<vmem>>) attributes {dimension_semantics = [#tpu.dimension_semantics<parallel>, #tpu.dimension_semantics<parallel>, #tpu.dimension_semantics<parallel>], iteration_bounds = array<i64: 2, 3, 1>, scalar_prefetch = 0 : i64, scratch_operands = 0 : i64, tpu.core_type = #tpu.core_type<tc>, window_params = [{transform_indices = @transform_0, window_bounds = array<i64: 3>}, {transform_indices = @transform_1, window_bounds = array<i64: 3>}, {transform_indices = @transform_2, window_bounds = array<i64: 1, 1, 2, 128>}, {transform_indices = @transform_3, window_bounds = array<i64: 1, 1, 2, 128>}]} {
    %0 = arith.index_cast %arg1 : i32 to index
    %1 = memref.load %arg3[%0] : memref<3xf32, #tpu.memory_space<smem>>
    %2 = arith.index_cast %arg1 : i32 to index
    %3 = memref.load %arg4[%2] : memref<3xf32, #tpu.memory_space<smem>>
    %c0 = arith.constant 0 : index
    %c0_0 = arith.constant 0 : index
    %c0_1 = arith.constant 0 : index
    %c0_2 = arith.constant 0 : index
    %4 = vector.load %arg5[%c0, %c0_0, %c0_1, %c0_2] : memref<1x1x2x128xf32, #tpu.memory_space<vmem>>, vector<1x1x2x128xf32>
    %5 = vector.broadcast %1 : f32 to vector<1x1x2x128xf32>
    %6 = arith.mulf %4, %5 : vector<1x1x2x128xf32>
    %7 = vector.broadcast %3 : f32 to vector<1x1x2x128xf32>
    %8 = arith.addf %6, %7 : vector<1x1x2x128xf32>
    %c0_3 = arith.constant 0 : index
    %c0_4 = arith.constant 0 : index
    %c0_5 = arith.constant 0 : index
    %c0_6 = arith.constant 0 : index
    %9 = vector.load %arg6[%c0_3, %c0_4, %c0_5, %c0_6] : memref<1x1x2x128xf32, #tpu.memory_space<vmem>>, vector<1x1x2x128xf32>
    tpu.vector_store %arg6[%c0_3, %c0_4, %c0_5, %c0_6], %8 {strides = array<i32>} : memref<1x1x2x128xf32, #tpu.memory_space<vmem>>, vector<1x1x2x128xf32>,
    return
  }
  func.func @transform_0(%arg0: i32, %arg1: i32, %arg2: i32) -> i32 {
    %c0_i32 = arith.constant 0 : i32
    %c0_i32_0 = arith.constant 0 : i32
    return %c0_i32 : i32
  }
  func.func @transform_1(%arg0: i32, %arg1: i32, %arg2: i32) -> i32 {
    %c0_i32 = arith.constant 0 : i32
    %c0_i32_0 = arith.constant 0 : i32
    return %c0_i32 : i32
  }
  func.func @transform_2(%arg0: i32, %arg1: i32, %arg2: i32) -> (i32, i32, i32, i32) {
    %c0_i32 = arith.constant 0 : i32
    %c0_i32_0 = arith.constant 0 : i32
    return %arg0, %arg1, %arg2, %c0_i32 : i32, i32, i32, i32
  }
  func.func @transform_3(%arg0: i32, %arg1: i32, %arg2: i32) -> (i32, i32, i32, i32) {
    %c0_i32 = arith.constant 0 : i32
    %c0_i32_0 = arith.constant 0 : i32
    return %arg0, %arg1, %arg2, %c0_i32 : i32, i32, i32, i32
  }
}

</mosaic_0001>

<llo_original>
// kernel: tpu_custom_call.1
$region0: #{tpu_custom_call.1}
  #allocation0 [shape = 'u32[]', space=smem, size = 0x4, offset = 0x4, fixed_abs, tag = 'smem constant byte address 0x4 - core index']
  #allocation1 [shape = 'u32[72,128]{1,0:T(1,128)}', space=vmem, size = 0x9000, scoped, tag = 'internal scratch']
  %s0 = inlined_call_operand.hbm [shape: f32[3], index: 0, kind: input, shape index: {}]
  %s1 = inlined_call_operand.hbm [shape: f32[3], index: 1, kind: input, shape index: {}]
  %s2 = inlined_call_operand.hbm [shape: f32[2,3,2,128], index: 2, kind: input, shape index: {}]
  %s3 = inlined_call_operand.hbm [shape: f32[2,3,2,128], index: 3, kind: output, shape index: {}]
  %s4 = sld [smem:[#allocation0]]
  $region57: #{tpu_custom_call.1} parent=0
    _
  %s6 = ssub.s32 1, %s4
  %s7 = scalar_select 0, %s6, %s4
  $region1: #{tpu_custom_call.1} parent=0
    #allocation2 [shape = 'u8[512]{0}', space=smem, size = 0x200, scoped, tag = 'input window, operand 0, single buffered']
    #allocation3 [shape = 's32[2]{0}', space=sflag, size = 0x8, scoped, tag = 'scoped memory for tpu_custom_call.1']
    #allocation4 [shape = 's32[2]{0}', space=sflag, size = 0x8, scoped, tag = 'scoped memory for tpu_custom_call.1']
    #allocation5 [shape = 's32[2]{0}', space=sflag, size = 0x8, scoped, tag = 'scoped memory for tpu_custom_call.1']
    #allocation6 [shape = 'u8[512]{0}', space=smem, size = 0x200, scoped, tag = 'input window, operand 1, single buffered']
    #allocation7 [shape = 's32[1]{0}', space=sflag, size = 0x4, scoped, tag = 'scoped memory for tpu_custom_call.1']
    #allocation8 [shape = 'u8[2048]{0}', space=vmem, size = 0x800, scoped, tag = 'input window, operand 2']
    #allocation9 [shape = 'u8[2048]{0}', space=vmem, size = 0x800, scoped, tag = 'output window, operand 0']
    %8 = vsyncpa [#allocation5], 0
    %9 = vsyncpa [#allocation7], 0
    %10 = vsyncpa [#allocation3], 0
    %s11 = scalar_lea.sflag [#allocation3], 1
    %12 = vsyncpa %s11, 0
    %13 = vsyncpa [#allocation4], 0
    %s14 = scalar_lea.sflag [#allocation4], 1
    %15 = vsyncpa %s14, 0
    loop: start=0, step=1, limit=8
    $region2: #{tpu_custom_call.1} parent=1 // loop_pre_header
      _
    $region3: #{tpu_custom_call.1} parent=1 // loop_header
      %s17 = sphi 0, %s21
      %p18 = scmp.ge.s32.totalorder %s17, 8
      %s24 = sphi 0, %s43
      %s25 = sphi 0, %s39
      %s26 = sphi 0, %s35
      %s27 = sphi 0, %s24
      %s28 = sphi 0, %s25
      %s29 = sphi 0, %s26
      %s30 = sphi 0, %s27
      %s31 = sphi 0, %s28
      %s32 = sphi 0, %s29
      %s44 = sphi 0, %s44
      %s46 = sphi 0, %s44
      %s47 = sphi 0, %s46
      %s61 = sphi 0, %s47
      %s65 = sphi 0, %s65
      %s67 = sphi 0, %s65
      %s68 = sphi 0, %s67
      %s82 = sphi 0, %s68
      %s92 = sphi 0, %s94
      %s95 = sphi 0, %s92
      %s96 = sphi 0, %s95
      %s112 = sphi 0, %s96
      %s122 = sphi 0, %s124
      %s125 = sphi 0, %s122
      %s126 = sphi 0, %s125
      %s142 = sphi 0, %s126
    $region4: #{tpu_custom_call.1} parent=1 // loop_header_branch
      %20 = sbr.rel (%p18) target = $region8
    $region5: #{tpu_custom_call.1} parent=1 // loop_body
      %s22 = ssub.s32 %s17, 1
      %s23 = ssub.s32 %s17, 2
      %s33 = sadd.s32 1, %s26
      %p34 = scmp.ge.s32.totalorder %s33, 1
      %s35 = scalar_select %p34, 0, %s33
      %s36 = sadd.s32 1, %s25
      %s37 = scalar_select %p34, %s36, %s25
      %p38 = scmp.ge.s32.totalorder %s37, 3
      %s39 = scalar_select %p38, 0, %s37
      %s40 = sadd.s32 1, %s24
      %s41 = scalar_select %p38, %s40, %s24
      %p42 = scmp.ge.s32.totalorder %s41, 2
      %s43 = scalar_select %p42, 0, %s41
      %s45 = sadd.s32 %s44, 1
      %p48 = scmp.eq.s32.totalorder %s17, 5
      %p49 = scmp.ne.s32.totalorder %s44, %s46
      %p50 = scmp.eq.s32.totalorder %s17, 0
      %p51 = por %p49, %p50
      %p52 = scmp.ne.s32.totalorder %s44, %s46
      %p53 = scmp.eq.s32.totalorder %s22, 5
      %p54 = por %p52, %p53
      %p55 = scmp.ne.s32.totalorder %s46, %s47
      %p56 = scmp.eq.s32.totalorder %s22, 0
      %p57 = por %p55, %p56
      %p58 = scmp.ne.s32.totalorder %s46, %s47
      %p59 = scmp.eq.s32.totalorder %s23, 5
      %p60 = por %p58, %p59
      %p62 = scmp.ne.s32.totalorder %s47, %s61
      %p63 = scmp.eq.s32.totalorder %s23, 0
      %p64 = por %p62, %p63
      %s66 = sadd.s32 %s65, 1
      %p69 = scmp.eq.s32.totalorder %s17, 5
      %p70 = scmp.ne.s32.totalorder %s65, %s67
      %p71 = scmp.eq.s32.totalorder %s17, 0
      %p72 = por %p70, %p71
      %p73 = scmp.ne.s32.totalorder %s65, %s67
      %p74 = scmp.eq.s32.totalorder %s22, 5
      %p75 = por %p73, %p74
      %p76 = scmp.ne.s32.totalorder %s67, %s68
      %p77 = scmp.eq.s32.totalorder %s22, 0
      %p78 = por %p76, %p77
      %p79 = scmp.ne.s32.totalorder %s67, %s68
      %p80 = scmp.eq.s32.totalorder %s23, 5
      %p81 = por %p79, %p80
      %p83 = scmp.ne.s32.totalorder %s68, %s82
      %p84 = scmp.eq.s32.totalorder %s23, 0
      %p85 = por %p83, %p84
      %s86 = ssub.s32 %s24, %s43
      %s87 = ssub.s32 %s25, %s39
      %s88 = sor.u32 %s86, %s87
      %s89 = ssub.s32 %s26, %s35
      %s90 = sor.u32 %s88, %s89
      %p91 = scmp.eq.s32.totalorder %s90, 0
      %s93 = sadd.s32 %s92, 1
      %s94 = scalar_select %p91, %s92, %s93
      %p97 = pneg %p91
      %p98 = scmp.eq.s32.totalorder %s17, 5
      %p99 = por %p97, %p98
      %p100 = scmp.ne.s32.totalorder %s92, %s95
      %p101 = scmp.eq.s32.totalorder %s17, 0
      %p102 = por %p100, %p101
      %p103 = scmp.ne.s32.totalorder %s92, %s95
      %p104 = scmp.eq.s32.totalorder %s22, 5
      %p105 = por %p103, %p104
      %p106 = scmp.ne.s32.totalorder %s95, %s96
      %p107 = scmp.eq.s32.totalorder %s22, 0
      %p108 = por %p106, %p107
      %p109 = scmp.ne.s32.totalorder %s95, %s96
      %p110 = scmp.eq.s32.totalorder %s23, 5
      %p111 = por %p109, %p110
      %p113 = scmp.ne.s32.totalorder %s96, %s112
      %p114 = scmp.eq.s32.totalorder %s23, 0
      %p115 = por %p113, %p114
      %s116 = ssub.s32 %s24, %s43
      %s117 = ssub.s32 %s25, %s39
      %s118 = sor.u32 %s116, %s117
      %s119 = ssub.s32 %s26, %s35
      %s120 = sor.u32 %s118, %s119
      %p121 = scmp.eq.s32.totalorder %s120, 0
      %s123 = sadd.s32 %s122, 1
      %s124 = scalar_select %p121, %s122, %s123
      %p127 = pneg %p121
      %p128 = scmp.eq.s32.totalorder %s17, 5
      %p129 = por %p127, %p128
      %p130 = scmp.ne.s32.totalorder %s122, %s125
      %p131 = scmp.eq.s32.totalorder %s17, 0
      %p132 = por %p130, %p131
      %p133 = scmp.ne.s32.totalorder %s122, %s125
      %p134 = scmp.eq.s32.totalorder %s22, 5
      %p135 = por %p133, %p134
      %p136 = scmp.ne.s32.totalorder %s125, %s126
      %p137 = scmp.eq.s32.totalorder %s22, 0
      %p138 = por %p136, %p137
      %p139 = scmp.ne.s32.totalorder %s125, %s126
      %p140 = scmp.eq.s32.totalorder %s23, 5
      %p141 = por %p139, %p140
      %p143 = scmp.ne.s32.totalorder %s126, %s142
      %p144 = scmp.eq.s32.totalorder %s23, 0
      %p145 = por %p143, %p144
      %p146 = scmp.le.s32.totalorder 1, %s17
      %p147 = scmp.lt.s32.totalorder %s17, 7
      %p148 = pnand %p146, %p147
      %p149 = pneg %p148
      // Predicated region
      $region9: #{tpu_custom_call.1} parent=5 // pred_check
        _
      $region10: #{tpu_custom_call.1} parent=5 // pred_check_branch
        %151 = sbr.rel (%p148) target = $region12
      $region11: #{tpu_custom_call.1} parent=5 // pred_region
        %s152 = ssub.s32 %s17, 1
        // Predicated region
        $region13: #{tpu_custom_call.1} parent=11 // pred_check
          %p153 = pneg %p57
        $region14: #{tpu_custom_call.1} parent=11 // pred_check_branch
          %155 = sbr.rel (%p153) target = $region16
        $region15: #{tpu_custom_call.1} parent=11 // pred_region
          %157 = vsyncadd [#allocation5], 0
          %s159 = sshll.u32 %s0, 4
          %s160 = int_to_ptr.hbm [resolvable:$true] %s159
          %162 = dma.hbm_to_smem %s160, 16, [#allocation2], [#allocation5]
        $region16: #{tpu_custom_call.1} parent=11 // pred_fallthru
          _
        // Predicated region
        $region17: #{tpu_custom_call.1} parent=11 // pred_check
          %p163 = pneg %p78
        $region18: #{tpu_custom_call.1} parent=11 // pred_check_branch
          %165 = sbr.rel (%p163) target = $region20
        $region19: #{tpu_custom_call.1} parent=11 // pred_region
          %167 = vsyncadd [#allocation7], 0
          %s169 = sshll.u32 %s1, 4
          %s170 = int_to_ptr.hbm [resolvable:$true] %s169
          %172 = dma.hbm_to_smem %s170, 16, [#allocation6], [#allocation7]
        $region20: #{tpu_custom_call.1} parent=11 // pred_fallthru
          _
      $region12: #{tpu_custom_call.1} parent=5 // pred_fallthru
        _
      %p173 = scmp.lt.s32.totalorder %s17, 6
      // Predicated region
      $region21: #{tpu_custom_call.1} parent=5 // pred_check
        %p174 = pneg %p173
      $region22: #{tpu_custom_call.1} parent=5 // pred_check_branch
        %176 = sbr.rel (%p174) target = $region24
      $region23: #{tpu_custom_call.1} parent=5 // pred_region
        // Predicated region
        $region25: #{tpu_custom_call.1} parent=23 // pred_check
          %p177 = pneg %p102
        $region26: #{tpu_custom_call.1} parent=23 // pred_check_branch
          %179 = sbr.rel (%p177) target = $region28
        $region27: #{tpu_custom_call.1} parent=23 // pred_region
          %s180 = sand.u32 %s92, 1
          %s181 = scalar_lea.sflag [#allocation3], %s180
          %s182 = sand.u32 %s92, 1
          %s183 = smul.addr %s182, 2
          %s184 = scalar_lea.vmem [#allocation8], %s183
          %186 = vsyncadd %s181, 0
          %s187 = sadd.s32 %s26, %s25
          %s188 = smul.addr %s24, 3
          %s189 = sadd.s32 %s187, %s188
          %s190 = smul.addr %s189, 2
          %s191 = scalar_lea.hbm %s2, %s190
          %s193 = sshll.u32 %s191, 4
          %s194 = int_to_ptr.hbm [resolvable:$true] %s193
          %s195 = sshll.u32 %s184, 4
          %s196 = int_to_ptr.vmem [resolvable:$true] %s195
          %198 = dma.hbm_to_vmem [thread:$0]  %s194, 32, %s196, %s181
        $region28: #{tpu_custom_call.1} parent=23 // pred_fallthru
          _
      $region24: #{tpu_custom_call.1} parent=5 // pred_fallthru
        _
      %p199 = scmp.le.s32.totalorder 1, %s17
      %p200 = scmp.lt.s32.totalorder %s17, 7
      %p201 = pnand %p199, %p200
      %p202 = pneg %p201
      // Predicated region
      $region29: #{tpu_custom_call.1} parent=5 // pred_check
        _
      $region30: #{tpu_custom_call.1} parent=5 // pred_check_branch
        %204 = sbr.rel (%p201) target = $region32
      $region31: #{tpu_custom_call.1} parent=5 // pred_region
        %s205 = ssub.s32 %s17, 1
        // Predicated region
        $region33: #{tpu_custom_call.1} parent=31 // pred_check
          %p206 = pneg %p57
        $region34: #{tpu_custom_call.1} parent=31 // pred_check_branch
          %208 = sbr.rel (%p206) target = $region36
        $region35: #{tpu_custom_call.1} parent=31 // pred_region
          %210 = dma.done [#allocation5], 16
        $region36: #{tpu_custom_call.1} parent=31 // pred_fallthru
          _
        // Predicated region
        $region37: #{tpu_custom_call.1} parent=31 // pred_check
          %p211 = pneg %p78
        $region38: #{tpu_custom_call.1} parent=31 // pred_check_branch
          %213 = sbr.rel (%p211) target = $region40
        $region39: #{tpu_custom_call.1} parent=31 // pred_region
          %215 = dma.done [#allocation7], 16
        $region40: #{tpu_custom_call.1} parent=31 // pred_fallthru
          _
        %s216 = sand.u32 %s95, 1
        %s217 = scalar_lea.sflag [#allocation3], %s216
        %s218 = sand.u32 %s95, 1
        %s219 = smul.addr %s218, 2
        %s220 = scalar_lea.vmem [#allocation8], %s219
        // Predicated region
        $region41: #{tpu_custom_call.1} parent=31 // pred_check
          %p221 = pneg %p108
        $region42: #{tpu_custom_call.1} parent=31 // pred_check_branch
          %223 = sbr.rel (%p221) target = $region44
        $region43: #{tpu_custom_call.1} parent=31 // pred_region
          %225 = dma.done %s217, 32
        $region44: #{tpu_custom_call.1} parent=31 // pred_fallthru
          _
        %226 = sfence
        %p227 = pneg %p57
        %p228 = pneg %p54
        %p229 = pneg %p78
        %p230 = pneg %p75
        %s231 = sand.u32 %s95, 1
        %s232 = scalar_lea.sflag [#allocation3], %s231
        %s233 = sand.u32 %s95, 1
        %s234 = smul.addr %s233, 2
        %s235 = scalar_lea.vmem [#allocation8], %s234
        %p236 = pneg %p108
        %p237 = pneg %p105
        %p238 = pneg %p138
        %p239 = pneg %p135
        %s240 = sand.u32 %s125, 1
        %s241 = scalar_lea.sflag [#allocation4], %s240
        %s242 = sand.u32 %s125, 1
        %s243 = smul.addr %s242, 2
        %s244 = scalar_lea.vmem [#allocation9], %s243
        %s245 = sld [smem:[#allocation2 + %s28]]
        %s246 = sld [smem:[#allocation6 + %s28]]
        %v247 = vld [vmem:[%s220] sm:$0x3]
        %v248 = vstv %s245
        %v249 = vmul.f32 %v247, %v248
        %v250 = vstv %s246
        %v251 = vadd.f32 %v249, %v250
        %252 = vst [vmem:[%s244] sm:$0x3] %v251
        %s253 = sand.u32 %s125, 1
        %s254 = scalar_lea.sflag [#allocation4], %s253
        %s255 = sand.u32 %s125, 1
        %s256 = smul.addr %s255, 2
        %s257 = scalar_lea.vmem [#allocation9], %s256
        // Predicated region
        $region45: #{tpu_custom_call.1} parent=31 // pred_check
          %p258 = pneg %p135
        $region46: #{tpu_custom_call.1} parent=31 // pred_check_branch
          %260 = sbr.rel (%p258) target = $region48
        $region47: #{tpu_custom_call.1} parent=31 // pred_region
          %262 = vsyncadd %s254, 0
          %s263 = sadd.s32 %s29, %s28
          %s264 = smul.addr %s27, 3
          %s265 = sadd.s32 %s263, %s264
          %s266 = smul.addr %s265, 2
          %s267 = scalar_lea.hbm %s3, %s266
          %s269 = sshll.u32 %s257, 4
          %s270 = int_to_ptr.vmem [resolvable:$true] %s269
          %s271 = sshll.u32 %s267, 4
          %s272 = int_to_ptr.hbm [resolvable:$true] %s271
          %274 = dma.vmem_to_hbm [thread:$0]  %s270, 32, %s272, %s254
        $region48: #{tpu_custom_call.1} parent=31 // pred_fallthru
          _
      $region32: #{tpu_custom_call.1} parent=5 // pred_fallthru
        _
      %p275 = scmp.le.s32.totalorder 2, %s17
      // Predicated region
      $region49: #{tpu_custom_call.1} parent=5 // pred_check
        %p276 = pneg %p275
      $region50: #{tpu_custom_call.1} parent=5 // pred_check_branch
        %278 = sbr.rel (%p276) target = $region52
      $region51: #{tpu_custom_call.1} parent=5 // pred_region
        %s279 = ssub.s32 %s17, 2
        // Predicated region
        $region53: #{tpu_custom_call.1} parent=51 // pred_check
          %p280 = pneg %p141
        $region54: #{tpu_custom_call.1} parent=51 // pred_check_branch
          %282 = sbr.rel (%p280) target = $region56
        $region55: #{tpu_custom_call.1} parent=51 // pred_region
          %s283 = sand.u32 %s126, 1
          %s284 = scalar_lea.sflag [#allocation4], %s283
          %s285 = sand.u32 %s126, 1
          %s286 = smul.addr %s285, 2
          %s287 = scalar_lea.vmem [#allocation9], %s286
          %289 = dma.done %s284, 32
        $region56: #{tpu_custom_call.1} parent=51 // pred_fallthru
          _
      $region52: #{tpu_custom_call.1} parent=5 // pred_fallthru
        _
    $region6: #{tpu_custom_call.1} parent=1 // loop_footer
      %s21 = sadd.s32 1, %s17
    $region7: #{tpu_custom_call.1} parent=1 // loop_footer_branch
      %16 = sbr.rel target = $region3
    $region8: #{tpu_custom_call.1} parent=1 // loop_exit
      _
    %290 = vsyncpa [#allocation3], 1
    %s291 = scalar_lea.sflag [#allocation3], 1
    %292 = vsyncpa %s291, 1
    %293 = vsyncpa [#allocation4], 1
    %s294 = scalar_lea.sflag [#allocation4], 1
    %295 = vsyncpa %s294, 1
    %296 = vsyncpa [#allocation5], 1
    %s297 = scalar_lea.sflag [#allocation5], 1
    %298 = vsyncpa %s297, 1
    %299 = vsyncpa [#allocation7], 1

</llo_original>
